<compile_context>
chip_gen: v7x
topology: tpu7x:2x2x1
jax: 0.10.0
libtpu: 0.0.40
codegen_flags: <defaults>
</compile_context>

<pallas_src>
import functools

import jax
import jax.numpy as jnp
from jax.experimental import pallas as pl
from jax.experimental.pallas import tpu as pltpu


def _round_up(x: int, m: int) -> int:
    return (x + m - 1) // m * m


def _lnet_kernel(x_ref, w_ref, b_ref, o_ref, acc_ref):
    # x_ref  : (TB, TK) input tile (any float dtype; cast to f32 on-chip)
    # w_ref  : (1, TK)  folded (pool * linear) weights, lane-dense
    # b_ref  : (1, 1)   bias scalar in SMEM
    # o_ref  : (TB, 1)  output tile
    # acc_ref: (TB, 1)  f32 VMEM accumulator, persistent across the K axis
    k = pl.program_id(1)

    @pl.when(k == 0)
    def _init():
        acc_ref[...] = jnp.zeros_like(acc_ref)

    x = x_ref[...].astype(jnp.float32)
    w = w_ref[...].astype(jnp.float32)          # (1, TK), broadcasts over rows
    acc_ref[...] += jnp.sum(x * w, axis=-1, keepdims=True)

    @pl.when(k == pl.num_programs(1) - 1)
    def _finalize():
        y = acc_ref[...] + b_ref[0, 0]
        o_ref[...] = jnp.clip(y, 0.0, 1.0).astype(o_ref.dtype)


@functools.partial(jax.jit, static_argnames=("block_b", "block_k"))
def lnet_forward(x_nchw, weight, bias, *, block_b=None, block_k=None):
    """LNet forward.

    x_nchw: (B, C, H, W); weight: (1, C); bias: (1,)  ->  (B, 1) float32.
    """
    B, C, H, W = x_nchw.shape
    HW = H * W
    K = C * HW

    # ---- JAX-side glue: fold pool + linear into one lane-dense weight ----
    x2d = x_nchw.reshape(B, K)                                    # (B, C*H*W)
    w_vec = weight.reshape(C).astype(jnp.float32) / jnp.float32(HW)
    w2d = jnp.repeat(w_vec, HW).reshape(1, K)                     # (1, C*H*W)
    b2d = bias.reshape(1, 1).astype(jnp.float32)

    # ---- Tile sizing (generation-safe: ~2 MiB input tiles, dbl-buffered) --
    if block_b is None:
        block_b = min(_round_up(B, 8), 256)
    if block_k is None:
        block_k = min(_round_up(K, 128), 2048)
    B_pad = _round_up(B, block_b)
    K_pad = _round_up(K, block_k)
    if B_pad != B or K_pad != K:
        # Zero-padding is exact: padded lanes contribute 0 to the weighted
        # sum; padded batch rows are sliced off below.
        x2d = jnp.pad(x2d, ((0, B_pad - B), (0, K_pad - K)))
        w2d = jnp.pad(w2d, ((0, 0), (0, K_pad - K)))

    grid = (B_pad // block_b, K_pad // block_k)
    bytes_accessed = (B_pad * K_pad * x2d.dtype.itemsize
                      + grid[0] * K_pad * 4 + B_pad * 4)

    out = pl.pallas_call(
        _lnet_kernel,
        out_shape=jax.ShapeDtypeStruct((B_pad, 1), jnp.float32),
        grid=grid,
        in_specs=[
            pl.BlockSpec((block_b, block_k), lambda i, k: (i, k)),
            pl.BlockSpec((1, block_k), lambda i, k: (0, k)),
            pl.BlockSpec(memory_space=pltpu.MemorySpace.SMEM),
        ],
        out_specs=pl.BlockSpec((block_b, 1), lambda i, k: (i, 0)),
        scratch_shapes=[pltpu.VMEM((block_b, 1), jnp.float32)],
        compiler_params=pltpu.CompilerParams(
            dimension_semantics=("parallel", "arbitrary"),
            vmem_limit_bytes=32 * 1024 * 1024,
        ),
        cost_estimate=pl.CostEstimate(
            flops=2 * B_pad * K_pad,
            transcendentals=0,
            bytes_accessed=bytes_accessed,
        ),
    )(x2d, w2d, b2d)
    return out[:B]


def lnet_reference(x_nchw, weight, bias):
    pooled = jnp.mean(x_nchw, axis=(2, 3))                 # (B, C)
    y = pooled @ weight.T + bias                           # (B, 1)
    return jnp.clip(y, 0.0, 1.0)


if __name__ == "__main__":
    key = jax.random.PRNGKey(0)
    k_x, k_w, k_b = jax.random.split(key, 3)

    B, C, H, W = 2, 4, 16, 16
    x = jax.random.normal(k_x, (B, C, H, W), dtype=jnp.float32)

    # nn.Linear(C, 1) style init: uniform(-1/sqrt(C), 1/sqrt(C)).
    bound = 1.0 / jnp.sqrt(jnp.float32(C))
    weight = jax.random.uniform(k_w, (1, C), jnp.float32, -bound, bound)
    bias = jax.random.uniform(k_b, (1,), jnp.float32, -bound, bound)

    out = jax.block_until_ready(lnet_forward(x, weight, bias))
    ref = lnet_reference(x, weight, bias)

    assert out.shape == (B, 1), out.shape
    assert jnp.allclose(out, ref, atol=1e-5, rtol=1e-5), (out, ref)

    print("KERNEL_OK")
</pallas_src>

<mosaic_0001>
module attributes {stable_mosaic.version = 11 : i64} {
  func.func @_lnet_kernel(%arg0: i32, %arg1: i32, %arg2: memref<8x1024xf32, #tpu.memory_space<vmem>>, %arg3: memref<1x1024xf32, #tpu.memory_space<vmem>>, %arg4: memref<1x1xf32, #tpu.memory_space<smem>>, %arg5: memref<8x1xf32, #tpu.memory_space<vmem>>, %arg6: memref<8x1xf32, #tpu.memory_space<vmem>>) attributes {dimension_semantics = [#tpu.dimension_semantics<parallel>, #tpu.dimension_semantics<arbitrary>], iteration_bounds = array<i64: 1, 1>, scalar_prefetch = 0 : i64, scratch_operands = 1 : i64, tpu.core_type = #tpu.core_type<tc>, window_params = [{transform_indices = @transform_0, window_bounds = array<i64: 8, 1024>}, {transform_indices = @transform_1, window_bounds = array<i64: 1, 1024>}, {transform_indices = @transform_2, window_bounds = array<i64: 1, 1>}, {transform_indices = @transform_3, window_bounds = array<i64: 8, 1>}]} {
    %c0_i32 = arith.constant 0 : i32
    %0 = arith.cmpi eq, %arg1, %c0_i32 : i32
    %1 = arith.extui %0 : i1 to i32
    %c0_i32_0 = arith.constant 0 : i32
    %2 = arith.cmpi ne, %1, %c0_i32_0 : i32
    scf.if %2 {
      %cst_10 = arith.constant 0.000000e+00 : f32
      %15 = vector.broadcast %cst_10 : f32 to vector<8x1xf32>
      %c0_11 = arith.constant 0 : index
      %c0_12 = arith.constant 0 : index
      %16 = vector.load %arg6[%c0_11, %c0_12] : memref<8x1xf32, #tpu.memory_space<vmem>>, vector<8x1xf32>
      tpu.vector_store %arg6[%c0_11, %c0_12], %15 {strides = array<i32>} : memref<8x1xf32, #tpu.memory_space<vmem>>, vector<8x1xf32>,
    } else {
    }
    %c0 = arith.constant 0 : index
    %c0_1 = arith.constant 0 : index
    %3 = vector.load %arg2[%c0, %c0_1] : memref<8x1024xf32, #tpu.memory_space<vmem>>, vector<8x1024xf32>
    %c0_2 = arith.constant 0 : index
    %c0_3 = arith.constant 0 : index
    %4 = vector.load %arg3[%c0_2, %c0_3] : memref<1x1024xf32, #tpu.memory_space<vmem>>, vector<1x1024xf32>
    %c0_4 = arith.constant 0 : index
    %c0_5 = arith.constant 0 : index
    %5 = vector.load %arg6[%c0_4, %c0_5] : memref<8x1xf32, #tpu.memory_space<vmem>>, vector<8x1xf32>
    %6 = vector.broadcast %4 : vector<1x1024xf32> to vector<8x1024xf32>
    %7 = arith.mulf %3, %6 : vector<8x1024xf32>
    %cst = arith.constant dense<0.000000e+00> : vector<8xf32>
    %8 = vector.multi_reduction <add>, %7, %cst [1] : vector<8x1024xf32> to vector<8xf32>
    %9 = vector.shape_cast %8 : vector<8xf32> to vector<8x1xf32>
    %10 = arith.addf %5, %9 : vector<8x1xf32>
    %c0_6 = arith.constant 0 : index
    %c0_7 = arith.constant 0 : index
    %11 = vector.load %arg6[%c0_6, %c0_7] : memref<8x1xf32, #tpu.memory_space<vmem>>, vector<8x1xf32>
    tpu.vector_store %arg6[%c0_6, %c0_7], %10 {strides = array<i32>} : memref<8x1xf32, #tpu.memory_space<vmem>>, vector<8x1xf32>,
    %c0_i32_8 = arith.constant 0 : i32
    %12 = arith.cmpi eq, %arg1, %c0_i32_8 : i32
    %13 = arith.extui %12 : i1 to i32
    %c0_i32_9 = arith.constant 0 : i32
    %14 = arith.cmpi ne, %13, %c0_i32_9 : i32
    scf.if %14 {
      %c0_10 = arith.constant 0 : index
      %c0_11 = arith.constant 0 : index
      %15 = vector.load %arg6[%c0_10, %c0_11] : memref<8x1xf32, #tpu.memory_space<vmem>>, vector<8x1xf32>
      %c0_12 = arith.constant 0 : index
      %c0_13 = arith.constant 0 : index
      %16 = memref.load %arg4[%c0_12, %c0_13] : memref<1x1xf32, #tpu.memory_space<smem>>
      %17 = vector.broadcast %16 : f32 to vector<8x1xf32>
      %18 = arith.addf %15, %17 : vector<8x1xf32>
      %cst_14 = arith.constant 0.000000e+00 : f32
      %cst_15 = arith.constant 1.000000e+00 : f32
      %19 = vector.broadcast %cst_14 : f32 to vector<8x1xf32>
      %20 = arith.maximumf %19, %18 : vector<8x1xf32>
      %21 = vector.broadcast %cst_15 : f32 to vector<8x1xf32>
      %22 = arith.minimumf %21, %20 : vector<8x1xf32>
      %c0_16 = arith.constant 0 : index
      %c0_17 = arith.constant 0 : index
      %23 = vector.load %arg5[%c0_16, %c0_17] : memref<8x1xf32, #tpu.memory_space<vmem>>, vector<8x1xf32>
      tpu.vector_store %arg5[%c0_16, %c0_17], %22 {strides = array<i32>} : memref<8x1xf32, #tpu.memory_space<vmem>>, vector<8x1xf32>,
    } else {
    }
    return
  }
  func.func @transform_0(%arg0: i32, %arg1: i32) -> (i32, i32) {
    %c0_i32 = arith.constant 0 : i32
    return %arg0, %arg1 : i32, i32
  }
  func.func @transform_1(%arg0: i32, %arg1: i32) -> (i32, i32) {
    %c0_i32 = arith.constant 0 : i32
    %c0_i32_0 = arith.constant 0 : i32
    return %c0_i32, %arg1 : i32, i32
  }
  func.func @transform_2(%arg0: i32, %arg1: i32) -> (i32, i32) {
    %c0_i32 = arith.constant 0 : i32
    %c0_i32_0 = arith.constant 0 : i32
    %c0_i32_1 = arith.constant 0 : i32
    return %c0_i32, %c0_i32_0 : i32, i32
  }
  func.func @transform_3(%arg0: i32, %arg1: i32) -> (i32, i32) {
    %c0_i32 = arith.constant 0 : i32
    %c0_i32_0 = arith.constant 0 : i32
    return %arg0, %c0_i32 : i32, i32
  }
}

</mosaic_0001>

<llo_original>
// kernel: lnet_forward.1
$region0: #{lnet_forward.1}
  #allocation0 [shape = 'u32[]', space=smem, size = 0x4, offset = 0x4, fixed_abs, tag = 'smem constant byte address 0x4 - core index']
  #allocation1 [shape = 'u32[144,128]{1,0:T(1,128)}', space=vmem, size = 0x12000, scoped, tag = 'internal scratch']
  #allocation2 [shape = 'f32[8,1]{1,0:T(8,128)}', space=vmem, size = 0x1000, scoped, tag = 'scratch operand']
  #allocation3 [shape = 'f32[1,1]{1,0:T(1,128)S(6)}', space=smem, size = 0x200, scoped, tag = 'scoped memory for lnet_forward.1']
  %s0 = inlined_call_operand.vmem [shape: f32[8,1024], index: 0, kind: input, shape index: {}]
  %s1 = inlined_call_operand.vmem [shape: f32[1,1024], index: 1, kind: input, shape index: {}]
  %s2 = inlined_call_operand.<no memory space> [shape: f32[1,1], index: 2, kind: input, shape index: {}]
  %s3 = inlined_call_operand.vmem [shape: f32[8,1], index: 3, kind: output, shape index: {}]
  %s4 = sld [smem:[#allocation0]]
  $region30: #{lnet_forward.1} parent=0
    _
  %s6 = ssub.s32 1, %s4
  %s7 = scalar_select 0, %s6, %s4
  %8 = sst [smem:[#allocation3]] %s2
  // Predicated region
  $region2: #{lnet_forward.1} parent=0 // pred_check
    _
  $region3: #{lnet_forward.1} parent=0 // pred_check_branch
    %10 = sbr.rel (0) target = $region5
  $region4: #{lnet_forward.1} parent=0 // pred_region
    _
  $region5: #{lnet_forward.1} parent=0 // pred_fallthru
    _
  // Predicated region
  $region6: #{lnet_forward.1} parent=0 // pred_check
    _
  $region7: #{lnet_forward.1} parent=0 // pred_check_branch
    %12 = sbr.rel (0) target = $region9
  $region8: #{lnet_forward.1} parent=0 // pred_region
    _
  $region9: #{lnet_forward.1} parent=0 // pred_fallthru
    _
  // Predicated region
  $region10: #{lnet_forward.1} parent=0 // pred_check
    _
  $region11: #{lnet_forward.1} parent=0 // pred_check_branch
    %14 = sbr.rel (0) target = $region13
  $region12: #{lnet_forward.1} parent=0 // pred_region
    _
  $region13: #{lnet_forward.1} parent=0 // pred_fallthru
    _
  %p15 = scmp.eq.s32.totalorder 0, 0
  // Predicated region
  $region14: #{lnet_forward.1} parent=0 // pred_check
    %p16 = pneg %p15
  $region15: #{lnet_forward.1} parent=0 // pred_check_branch
    %18 = sbr.rel (%p16) target = $region17
  $region16: #{lnet_forward.1} parent=0 // pred_region
    %vm19 = vcmask 7168
    %20 = vst.msk [vmem:[#allocation2] sm:$0xff] %vm19, 0.0
  $region17: #{lnet_forward.1} parent=0 // pred_fallthru
    _
  %v21 = vld [vmem:[%s0] sm:$0xff]
  %v22 = vld [vmem:[%s0 + $0x8] sm:$0xff]
  %v23 = vld [vmem:[%s0 + $0x10] sm:$0xff]
  %v24 = vld [vmem:[%s0 + $0x18] sm:$0xff]
  %v25 = vld [vmem:[%s0 + $0x20] sm:$0xff]
  %v26 = vld [vmem:[%s0 + $0x28] sm:$0xff]
  %v27 = vld [vmem:[%s0 + $0x30] sm:$0xff]
  %v28 = vld [vmem:[%s0 + $0x38] sm:$0xff]
  %v29 = vld [vmem:[%s1] sm:$0xff]
  %v30 = vld [vmem:[#allocation2] sm:$0xff]
  %v32 = vlaneseq
  %v33 = vshrl.u32 %v32, 7
  %v34 = vsub.s32 0, %v33
  %v35 = vrot.slane %v29, %v34
  %v36 = vlaneseq
  %v37 = vshrl.u32 %v36, 7
  %v38 = vsub.s32 1, %v37
  %v39 = vrot.slane %v29, %v38
  %v40 = vlaneseq
  %v41 = vshrl.u32 %v40, 7
  %v42 = vsub.s32 2, %v41
  %v43 = vrot.slane %v29, %v42
  %v44 = vlaneseq
  %v45 = vshrl.u32 %v44, 7
  %v46 = vsub.s32 3, %v45
  %v47 = vrot.slane %v29, %v46
  %v48 = vlaneseq
  %v49 = vshrl.u32 %v48, 7
  %v50 = vsub.s32 4, %v49
  %v51 = vrot.slane %v29, %v50
  %v52 = vlaneseq
  %v53 = vshrl.u32 %v52, 7
  %v54 = vsub.s32 5, %v53
  %v55 = vrot.slane %v29, %v54
  %v56 = vlaneseq
  %v57 = vshrl.u32 %v56, 7
  %v58 = vsub.s32 6, %v57
  %v59 = vrot.slane %v29, %v58
  %v60 = vlaneseq
  %v61 = vshrl.u32 %v60, 7
  %v62 = vsub.s32 7, %v61
  %v63 = vrot.slane %v29, %v62
  %v72 = vmul.f32 %v21, %v35
  %v73 = vmul.f32 %v22, %v39
  %v74 = vmul.f32 %v23, %v43
  %v75 = vmul.f32 %v24, %v47
  %v76 = vmul.f32 %v25, %v51
  %v77 = vmul.f32 %v26, %v55
  %v78 = vmul.f32 %v27, %v59
  %v79 = vmul.f32 %v28, %v63
  %v80 = vadd.f32 %v72, %v73
  %v81 = vadd.f32 %v80, %v74
  %v82 = vadd.f32 %v81, %v75
  %v83 = vadd.f32 %v82, %v76
  %v84 = vadd.f32 %v83, %v77
  %v85 = vadd.f32 %v84, %v78
  %v86 = vadd.f32 %v85, %v79
  %87 = vadd.xlane.f32.xlu0 %v86
  %v88 = vpop.xlane.xlu0 %87
  %v89 = vadd.f32 %v30, %v88
  %vm90 = vcmask 7168
  %91 = vst.msk [vmem:[#allocation2] sm:$0xff] %vm90, %v89
  // Predicated region
  $region18: #{lnet_forward.1} parent=0 // pred_check
    %p92 = pneg %p15
  $region19: #{lnet_forward.1} parent=0 // pred_check_branch
    %94 = sbr.rel (%p92) target = $region21
  $region20: #{lnet_forward.1} parent=0 // pred_region
    %v95 = vld [vmem:[#allocation2] sm:$0xff]
    %s96 = sld [smem:[#allocation3]]
    %v97 = vstv %s96
    %v98 = vadd.f32 %v95, %v97
    %v99 = vmax.f32 %v98, 0.0
    %v100 = vmin.f32 %v99, 1.0
    %101 = vst.msk [vmem:[%s3] sm:$0xff] %vm90, %v100
  $region21: #{lnet_forward.1} parent=0 // pred_fallthru
    _
  // Predicated region
  $region22: #{lnet_forward.1} parent=0 // pred_check
    _
  $region23: #{lnet_forward.1} parent=0 // pred_check_branch
    %103 = sbr.rel (0) target = $region25
  $region24: #{lnet_forward.1} parent=0 // pred_region
    _
  $region25: #{lnet_forward.1} parent=0 // pred_fallthru
    _
  // Predicated region
  $region26: #{lnet_forward.1} parent=0 // pred_check
    _
  $region27: #{lnet_forward.1} parent=0 // pred_check_branch
    %105 = sbr.rel (0) target = $region29
  $region28: #{lnet_forward.1} parent=0 // pred_region
    _
  $region29: #{lnet_forward.1} parent=0 // pred_fallthru
    _

</llo_original>
